<compile_context>
chip_gen: v7x
topology: tpu7x:2x2x1
jax: 0.10.0
libtpu: 0.0.40
codegen_flags: <defaults>
</compile_context>

<pallas_src>
import functools

import jax
import jax.numpy as jnp
from jax import lax
from jax.experimental import pallas as pl
from jax.experimental.pallas import tpu as pltpu

LANE = 128
SUBLANE = 8


def _round_up(a, b):
    return (a + b - 1) // b * b


def _vmem_capacity_bytes():
    try:
        info = pltpu.get_tpu_info()
        cap = getattr(info, "vmem_capacity_bytes", None)
        if cap:
            return int(cap)
    except Exception:
        pass
    return 64 * 2**20  # conservative default (v7x per-core VMEM)


def _downsample_kernel(planes_ref, w_ref, b_ref, out_ref, *, taps):
    """One (batch, output-row-tile) grid step.

    planes_ref: (P, TH, Wcp, Kp)   bf16 -- K-folded input planes
    w_ref:      (n_taps, Kp, Cop)  bf16 -- per-tap K-folded weight matrices
    b_ref:      (1, Cop)           f32
    out_ref:    (TH, Wo_p, Cop)    f32
    """
    th, wo_p, cop = out_ref.shape
    kp = planes_ref.shape[-1]

    acc = None
    # <=3 taps, unrolled at trace time; refs are sliced directly (no full-block load).
    for t, (p, dw) in enumerate(taps):
        lhs = planes_ref[p, :, dw:dw + wo_p, :].reshape(th * wo_p, kp)
        part = jnp.dot(lhs, w_ref[t], preferred_element_type=jnp.float32)
        acc = part if acc is None else acc + part
    out_ref[...] = (acc + b_ref[...]).reshape(th, wo_p, cop)


@functools.partial(jax.jit, static_argnames=("block_rows",))
def downsample_forward(x, weight, bias, t=None, *, block_rows=None):
    """Pallas equivalent of Downsample.forward(x, t) (t is ignored). NCHW in/out.

    x: (N, Cin, H, W), weight: (Cout, Cin, 3, 3) PyTorch layout, bias: (Cout,)
    """
    del t
    N, C, H, W = x.shape
    Cout, Cin, KH, KW = weight.shape
    assert (KH, KW) == (3, 3) and Cin == C

    Ho = (H - 1) // 2 + 1
    Wo = (W - 1) // 2 + 1
    Wo_p = _round_up(Wo, SUBLANE)        # reshape-friendly / lane-dense output width
    Cop = _round_up(Cout, LANE)          # lane-dense output stores

    # ---- tap-fusion strategy -------------------------------------------------
    full_fold = 9 * Cin <= 8 * LANE      # small-channel layers: fold all 9 taps
    if full_fold:
        Kp = _round_up(9 * Cin, LANE)
        P, Wcp = 1, Wo_p
        taps = ((0, 0),)                 # (plane index, column offset)
    else:
        Kp = _round_up(3 * Cin, LANE)    # fold the 3 kh taps; pad once after fold
        P, Wcp = 2, Wo_p + SUBLANE       # even plane keeps a 1-column halo
        taps = ((0, 0), (1, 0), (0, 1))  # kw = 0 (even), 1 (odd), 2 (even, +1 col)
    n_taps = len(taps)

    # ---- generation-aware tile height / VMEM budget ---------------------------
    vmem_cap = _vmem_capacity_bytes()
    vmem_budget = min(int(vmem_cap * 0.85), 110 * 2**20)
    per_row = (2 * P * Wcp * Kp * 2      # planes block, double-buffered (bf16)
               + 2 * Wo_p * Cop * 4      # output block, double-buffered (f32)
               + Wo_p * Cop * 4          # in-kernel f32 accumulator
               + Wo_p * Kp * 4)          # per-tap lhs temporary (slack)
    static_bytes = (2 * n_taps * Kp * Cop * 2    # weights (double-buffered)
                    + 2 * Cop * 4 + (2 << 20))   # bias + compiler scratch slack
    th_cap = max(1, (vmem_budget - static_bytes) // per_row)
    th_target = block_rows if block_rows is not None else max(
        pl.cdiv(1024, Wo_p), SUBLANE)    # aim for MXU M = TH*Wo_p >= ~1024
    TH = int(max(1, min(Ho, th_cap, th_target)))
    nT = pl.cdiv(Ho, TH)
    Ho_p = nT * TH
    # TODO(synk): for Cout >= 512 on v7x, add a Cout-tile grid axis instead of
    # holding the full padded Cout in one output block.

    # ---- XLA-side restructuring (single pass, no gathers) ---------------------
    # NCHW -> NHWC, zero-pad (1-pixel conv pad + alignment pad), then fold taps
    # into the channel/K axis with strided slices + one concat.
    x_nhwc = jnp.transpose(x, (0, 2, 3, 1))
    Hp, Wp = 2 * Ho_p + 1, 2 * Wo_p + 1
    xp = jnp.pad(x_nhwc, ((0, 0), (1, Hp - 1 - H), (1, Wp - 1 - W), (0, 0)))

    if full_fold:
        # cols[n,i,j,(kh*3+kw)*Cin + c] = xp[n, 2i+kh, 2j+kw, c]
        cols = jnp.concatenate(
            [xp[:, kh:kh + 2 * Ho_p:2, kw:kw + 2 * Wo_p:2, :]
             for kh in range(3) for kw in range(3)], axis=-1)
        planes = jnp.pad(cols, ((0, 0), (0, 0), (0, 0), (0, Kp - 9 * Cin)))
        planes = planes[:, None]                                  # (N,1,Ho_p,Wo_p,Kp)
        w_taps = jnp.transpose(weight, (2, 3, 1, 0)).reshape(1, 9 * Cin, Cout)
    else:
        # rows3[n,i,s, kh*Cin + c] = xp[n, 2i+kh, s, c]
        rows3 = jnp.concatenate(
            [xp[:, kh:kh + 2 * Ho_p:2, :, :] for kh in range(3)], axis=-1)
        even = rows3[:, :, 0:2 * Wo_p + 1:2, :]                   # cols 2j  (+1 halo)
        odd = rows3[:, :, 1:2 * Wo_p:2, :]                        # cols 2j+1
        even = jnp.pad(even, ((0, 0), (0, 0), (0, Wcp - (Wo_p + 1)),
                              (0, Kp - 3 * Cin)))
        odd = jnp.pad(odd, ((0, 0), (0, 0), (0, Wcp - Wo_p),
                            (0, Kp - 3 * Cin)))
        planes = jnp.stack([even, odd], axis=1)                   # (N,2,Ho_p,Wcp,Kp)
        # w_taps[kw, kh*Cin + c, cout]
        w_taps = jnp.transpose(weight, (3, 2, 1, 0)).reshape(3, 3 * Cin, Cout)

    planes = planes.astype(jnp.bfloat16)
    w_taps = jnp.pad(w_taps, ((0, 0), (0, Kp - w_taps.shape[1]),
                              (0, Cop - Cout))).astype(jnp.bfloat16)
    b_row = jnp.pad(bias, (0, Cop - Cout)).astype(jnp.float32).reshape(1, Cop)

    # ---- Pallas call -----------------------------------------------------------
    cost = pl.CostEstimate(
        flops=2 * N * nT * n_taps * (TH * Wo_p) * Kp * Cop,
        transcendentals=0,
        bytes_accessed=int(planes.size * 2 + w_taps.size * 2
                           + N * Ho_p * Wo_p * Cop * 4))

    out_padded = pl.pallas_call(
        functools.partial(_downsample_kernel, taps=taps),
        out_shape=jax.ShapeDtypeStruct((N, Ho_p, Wo_p, Cop), jnp.float32),
        grid_spec=pltpu.PrefetchScalarGridSpec(
            num_scalar_prefetch=0,
            grid=(N, nT),
            in_specs=[
                pl.BlockSpec((None, P, TH, Wcp, Kp),
                             lambda n, r: (n, 0, r, 0, 0)),
                pl.BlockSpec((n_taps, Kp, Cop), lambda n, r: (0, 0, 0)),
                pl.BlockSpec((1, Cop), lambda n, r: (0, 0)),
            ],
            out_specs=pl.BlockSpec((None, TH, Wo_p, Cop),
                                   lambda n, r: (n, r, 0, 0)),
        ),
        compiler_params=pltpu.CompilerParams(
            dimension_semantics=("parallel", "parallel"),
            vmem_limit_bytes=int(vmem_budget)),
        cost_estimate=cost,
    )(planes, w_taps, b_row)

    # (N, Ho_p, Wo_p, Cop) -> (N, Ho, Wo, Cout) -> NCHW (module contract).
    out = out_padded[:, :Ho, :Wo, :Cout]
    # TODO(synk): keep NHWC (and bf16) here if the downstream consumer accepts
    # it; the final transpose is an extra XLA pass kept only for NCHW parity.
    return jnp.transpose(out, (0, 3, 1, 2))


if __name__ == "__main__":
    key = jax.random.PRNGKey(0)
    N, C, H, W = 2, 4, 16, 16
    kx, kw_, kb, kt = jax.random.split(key, 4)

    x = jax.random.normal(kx, (N, C, H, W), dtype=jnp.float32)
    # Deterministic, PyTorch-like uniform init for Conv2d(C, C, 3, 3)
    fan_in = C * 3 * 3
    bound = 1.0 / (fan_in ** 0.5)
    weight = jax.random.uniform(kw_, (C, C, 3, 3), minval=-bound, maxval=bound,
                                dtype=jnp.float32)
    bias = jax.random.uniform(kb, (C,), minval=-bound, maxval=bound,
                              dtype=jnp.float32)
    t = jax.random.normal(kt, (N,), dtype=jnp.float32)  # ignored, as in the module

    out = downsample_forward(x, weight, bias, t)
    out = jax.block_until_ready(out)
    assert out.shape == (N, C, H // 2, W // 2), out.shape

    conv = functools.partial(
        lax.conv_general_dilated, window_strides=(2, 2),
        padding=((1, 1), (1, 1)),
        dimension_numbers=("NCHW", "OIHW", "NCHW"),
        precision=lax.Precision.HIGHEST)

    # Reference 1: same bf16 operand quantization as the kernel, f32 accumulate.
    xq = x.astype(jnp.bfloat16).astype(jnp.float32)
    wq = weight.astype(jnp.bfloat16).astype(jnp.float32)
    ref_bf16 = conv(xq, wq) + bias.reshape(1, C, 1, 1)
    err_bf16 = float(jnp.max(jnp.abs(out - ref_bf16)))
    assert jnp.allclose(out, ref_bf16, atol=2e-3, rtol=2e-3), err_bf16

    # Reference 2: full-f32 conv (semantic check; loose tol for bf16 operands).
    ref_f32 = conv(x, weight) + bias.reshape(1, C, 1, 1)
    err_f32 = float(jnp.max(jnp.abs(out - ref_f32)))
    assert jnp.allclose(out, ref_f32, atol=5e-2, rtol=5e-2), err_f32

    print("KERNEL_OK")
</pallas_src>

<mosaic_0001>
module attributes {stable_mosaic.version = 11 : i64} {
  func.func @_downsample_kernel(%arg0: i32, %arg1: i32, %arg2: memref<1x1x8x8x128xbf16, #tpu.memory_space<vmem>>, %arg3: memref<1x128x128xbf16, #tpu.memory_space<vmem>>, %arg4: memref<1x128xf32, #tpu.memory_space<vmem>>, %arg5: memref<1x8x8x128xf32, #tpu.memory_space<vmem>>) attributes {dimension_semantics = [#tpu.dimension_semantics<parallel>, #tpu.dimension_semantics<parallel>], iteration_bounds = array<i64: 2, 1>, scalar_prefetch = 0 : i64, scratch_operands = 0 : i64, tpu.core_type = #tpu.core_type<tc>, window_params = [{transform_indices = @transform_0, window_bounds = array<i64: 1, 1, 8, 8, 128>}, {pipeline_mode = #tpu.pipeline_mode<synchronous>, transform_indices = @transform_1, window_bounds = array<i64: 1, 128, 128>}, {pipeline_mode = #tpu.pipeline_mode<synchronous>, transform_indices = @transform_2, window_bounds = array<i64: 1, 128>}, {transform_indices = @transform_3, window_bounds = array<i64: 1, 8, 8, 128>}]} {
    %c0 = arith.constant 0 : index
    %c0_0 = arith.constant 0 : index
    %c0_1 = arith.constant 0 : index
    %c0_2 = arith.constant 0 : index
    %c0_3 = arith.constant 0 : index
    %0 = vector.load %arg2[%c0, %c0_0, %c0_1, %c0_2, %c0_3] : memref<1x1x8x8x128xbf16, #tpu.memory_space<vmem>>, vector<1x1x8x8x128xbf16>
    %1 = vector.shape_cast %0 : vector<1x1x8x8x128xbf16> to vector<8x8x128xbf16>
    %2 = vector.shape_cast %1 : vector<8x8x128xbf16> to vector<64x128xbf16>
    %c0_4 = arith.constant 0 : index
    %c0_5 = arith.constant 0 : index
    %c0_6 = arith.constant 0 : index
    %3 = vector.load %arg3[%c0_4, %c0_5, %c0_6] : memref<1x128x128xbf16, #tpu.memory_space<vmem>>, vector<1x128x128xbf16>
    %4 = vector.shape_cast %3 : vector<1x128x128xbf16> to vector<128x128xbf16>
    %cst = arith.constant dense<0.000000e+00> : vector<64x128xf32>
    %5 = tpu.matmul %2, %4, %cst {dimension_numbers = #tpu.dot_dimension_numbers<[1], [0], [0], [1], [0, 0, 1, 1], [], []>} : vector<64x128xbf16>, vector<128x128xbf16>, vector<64x128xf32> -> vector<64x128xf32>
    %c0_7 = arith.constant 0 : index
    %c0_8 = arith.constant 0 : index
    %6 = vector.load %arg4[%c0_7, %c0_8] : memref<1x128xf32, #tpu.memory_space<vmem>>, vector<1x128xf32>
    %7 = vector.broadcast %6 : vector<1x128xf32> to vector<64x128xf32>
    %8 = arith.addf %5, %7 : vector<64x128xf32>
    %9 = vector.shape_cast %8 : vector<64x128xf32> to vector<8x8x128xf32>
    %c0_9 = arith.constant 0 : index
    %c0_10 = arith.constant 0 : index
    %c0_11 = arith.constant 0 : index
    %c0_12 = arith.constant 0 : index
    %10 = vector.load %arg5[%c0_9, %c0_10, %c0_11, %c0_12] : memref<1x8x8x128xf32, #tpu.memory_space<vmem>>, vector<1x8x8x128xf32>
    %11 = vector.shape_cast %10 : vector<1x8x8x128xf32> to vector<8x8x128xf32>
    %12 = vector.shape_cast %9 : vector<8x8x128xf32> to vector<1x8x8x128xf32>
    tpu.vector_store %arg5[%c0_9, %c0_10, %c0_11, %c0_12], %12 {strides = array<i32>} : memref<1x8x8x128xf32, #tpu.memory_space<vmem>>, vector<1x8x8x128xf32>,
    return
  }
  func.func @transform_0(%arg0: i32, %arg1: i32) -> (i32, i32, i32, i32, i32) {
    %c0_i32 = arith.constant 0 : i32
    %c0_i32_0 = arith.constant 0 : i32
    %c0_i32_1 = arith.constant 0 : i32
    %c0_i32_2 = arith.constant 0 : i32
    return %arg0, %c0_i32, %arg1, %c0_i32_0, %c0_i32_1 : i32, i32, i32, i32, i32
  }
  func.func @transform_1(%arg0: i32, %arg1: i32) -> (i32, i32, i32) {
    %c0_i32 = arith.constant 0 : i32
    %c0_i32_0 = arith.constant 0 : i32
    %c0_i32_1 = arith.constant 0 : i32
    %c0_i32_2 = arith.constant 0 : i32
    return %c0_i32, %c0_i32_0, %c0_i32_1 : i32, i32, i32
  }
  func.func @transform_2(%arg0: i32, %arg1: i32) -> (i32, i32) {
    %c0_i32 = arith.constant 0 : i32
    %c0_i32_0 = arith.constant 0 : i32
    %c0_i32_1 = arith.constant 0 : i32
    return %c0_i32, %c0_i32_0 : i32, i32
  }
  func.func @transform_3(%arg0: i32, %arg1: i32) -> (i32, i32, i32, i32) {
    %c0_i32 = arith.constant 0 : i32
    %c0_i32_0 = arith.constant 0 : i32
    %c0_i32_1 = arith.constant 0 : i32
    return %arg0, %arg1, %c0_i32, %c0_i32_0 : i32, i32, i32, i32
  }
}

</mosaic_0001>

<llo_original>
// kernel: downsample_forward.1
$region0: #{downsample_forward.1}
  #allocation0 [shape = 'u32[]', space=smem, size = 0x4, offset = 0x4, fixed_abs, tag = 'smem constant byte address 0x4 - core index']
  #allocation1 [shape = 'u32[144,128]{1,0:T(1,128)}', space=vmem, size = 0x12000, scoped, tag = 'internal scratch']
  %s0 = inlined_call_operand.vmem [shape: bf16[2,1,8,8,128], index: 0, kind: input, shape index: {}]
  %s1 = inlined_call_operand.vmem [shape: bf16[1,128,128], index: 1, kind: input, shape index: {}]
  %s2 = inlined_call_operand.vmem [shape: f32[1,128], index: 2, kind: input, shape index: {}]
  %s3 = inlined_call_operand.vmem [shape: f32[2,8,8,128], index: 3, kind: output, shape index: {}]
  %s4 = sld [smem:[#allocation0]]
  $region45: #{downsample_forward.1} parent=0
    _
  %s6 = ssub.s32 1, %s4
  %s7 = scalar_select 0, %s6, %s4
  loop: start=0, step=1, limit=4
  $region2: #{downsample_forward.1} parent=0 // loop_pre_header
    _
  $region3: #{downsample_forward.1} parent=0 // loop_header
    %s9 = sphi 0, %s13
    %p10 = scmp.ge.s32.totalorder %s9, 4
    %s16 = sphi 0, %s28
    %s17 = sphi 0, %s24
    %s18 = sphi 0, %s16
    %s19 = sphi 0, %s17
    %s20 = sphi 0, %s18
    %s21 = sphi 0, %s19
    %s33 = sphi 0, %s35
    %s36 = sphi 0, %s33
    %s37 = sphi 0, %s36
    %s53 = sphi 0, %s37
    %s57 = sphi 0, %s57
    %s59 = sphi 0, %s57
    %s60 = sphi 0, %s59
    %s74 = sphi 0, %s60
    %s78 = sphi 0, %s78
    %s80 = sphi 0, %s78
    %s81 = sphi 0, %s80
    %s95 = sphi 0, %s81
    %s103 = sphi 0, %s105
    %s106 = sphi 0, %s103
    %s107 = sphi 0, %s106
    %s123 = sphi 0, %s107
  $region4: #{downsample_forward.1} parent=0 // loop_header_branch
    %12 = sbr.rel (%p10) target = $region8
  $region5: #{downsample_forward.1} parent=0 // loop_body
    %s14 = ssub.s32 %s9, 1
    %s15 = ssub.s32 %s9, 2
    %s22 = sadd.s32 1, %s17
    %p23 = scmp.ge.s32.totalorder %s22, 1
    %s24 = scalar_select %p23, 0, %s22
    %s25 = sadd.s32 1, %s16
    %s26 = scalar_select %p23, %s25, %s16
    %p27 = scmp.ge.s32.totalorder %s26, 2
    %s28 = scalar_select %p27, 0, %s26
    %s29 = ssub.s32 %s16, %s28
    %s30 = ssub.s32 %s17, %s24
    %s31 = sor.u32 %s29, %s30
    %p32 = scmp.eq.s32.totalorder %s31, 0
    %s34 = sadd.s32 %s33, 1
    %s35 = scalar_select %p32, %s33, %s34
    %p38 = pneg %p32
    %p39 = scmp.eq.s32.totalorder %s9, 1
    %p40 = por %p38, %p39
    %p41 = scmp.ne.s32.totalorder %s33, %s36
    %p42 = scmp.eq.s32.totalorder %s9, 0
    %p43 = por %p41, %p42
    %p44 = scmp.ne.s32.totalorder %s33, %s36
    %p45 = scmp.eq.s32.totalorder %s14, 1
    %p46 = por %p44, %p45
    %p47 = scmp.ne.s32.totalorder %s36, %s37
    %p48 = scmp.eq.s32.totalorder %s14, 0
    %p49 = por %p47, %p48
    %p50 = scmp.ne.s32.totalorder %s36, %s37
    %p51 = scmp.eq.s32.totalorder %s15, 1
    %p52 = por %p50, %p51
    %p54 = scmp.ne.s32.totalorder %s37, %s53
    %p55 = scmp.eq.s32.totalorder %s15, 0
    %p56 = por %p54, %p55
    %s58 = sadd.s32 %s57, 1
    %p61 = scmp.eq.s32.totalorder %s9, 1
    %p62 = scmp.ne.s32.totalorder %s57, %s59
    %p63 = scmp.eq.s32.totalorder %s9, 0
    %p64 = por %p62, %p63
    %p65 = scmp.ne.s32.totalorder %s57, %s59
    %p66 = scmp.eq.s32.totalorder %s14, 1
    %p67 = por %p65, %p66
    %p68 = scmp.ne.s32.totalorder %s59, %s60
    %p69 = scmp.eq.s32.totalorder %s14, 0
    %p70 = por %p68, %p69
    %p71 = scmp.ne.s32.totalorder %s59, %s60
    %p72 = scmp.eq.s32.totalorder %s15, 1
    %p73 = por %p71, %p72
    %p75 = scmp.ne.s32.totalorder %s60, %s74
    %p76 = scmp.eq.s32.totalorder %s15, 0
    %p77 = por %p75, %p76
    %s79 = sadd.s32 %s78, 1
    %p82 = scmp.eq.s32.totalorder %s9, 1
    %p83 = scmp.ne.s32.totalorder %s78, %s80
    %p84 = scmp.eq.s32.totalorder %s9, 0
    %p85 = por %p83, %p84
    %p86 = scmp.ne.s32.totalorder %s78, %s80
    %p87 = scmp.eq.s32.totalorder %s14, 1
    %p88 = por %p86, %p87
    %p89 = scmp.ne.s32.totalorder %s80, %s81
    %p90 = scmp.eq.s32.totalorder %s14, 0
    %p91 = por %p89, %p90
    %p92 = scmp.ne.s32.totalorder %s80, %s81
    %p93 = scmp.eq.s32.totalorder %s15, 1
    %p94 = por %p92, %p93
    %p96 = scmp.ne.s32.totalorder %s81, %s95
    %p97 = scmp.eq.s32.totalorder %s15, 0
    %p98 = por %p96, %p97
    %s99 = ssub.s32 %s16, %s28
    %s100 = ssub.s32 %s17, %s24
    %s101 = sor.u32 %s99, %s100
    %p102 = scmp.eq.s32.totalorder %s101, 0
    %s104 = sadd.s32 %s103, 1
    %s105 = scalar_select %p102, %s103, %s104
    %p108 = pneg %p102
    %p109 = scmp.eq.s32.totalorder %s9, 1
    %p110 = por %p108, %p109
    %p111 = scmp.ne.s32.totalorder %s103, %s106
    %p112 = scmp.eq.s32.totalorder %s9, 0
    %p113 = por %p111, %p112
    %p114 = scmp.ne.s32.totalorder %s103, %s106
    %p115 = scmp.eq.s32.totalorder %s14, 1
    %p116 = por %p114, %p115
    %p117 = scmp.ne.s32.totalorder %s106, %s107
    %p118 = scmp.eq.s32.totalorder %s14, 0
    %p119 = por %p117, %p118
    %p120 = scmp.ne.s32.totalorder %s106, %s107
    %p121 = scmp.eq.s32.totalorder %s15, 1
    %p122 = por %p120, %p121
    %p124 = scmp.ne.s32.totalorder %s107, %s123
    %p125 = scmp.eq.s32.totalorder %s15, 0
    %p126 = por %p124, %p125
    %p127 = scmp.le.s32.totalorder 1, %s9
    %p128 = scmp.lt.s32.totalorder %s9, 3
    %p129 = pnand %p127, %p128
    %p130 = pneg %p129
    // Predicated region
    $region9: #{downsample_forward.1} parent=5 // pred_check
      _
    $region10: #{downsample_forward.1} parent=5 // pred_check_branch
      %132 = sbr.rel (%p129) target = $region12
    $region11: #{downsample_forward.1} parent=5 // pred_region
      %s133 = ssub.s32 %s9, 1
      // Predicated region
      $region13: #{downsample_forward.1} parent=11 // pred_check
        %p134 = pneg %p70
      $region14: #{downsample_forward.1} parent=11 // pred_check_branch
        %136 = sbr.rel (%p134) target = $region16
      $region15: #{downsample_forward.1} parent=11 // pred_region
        _
      $region16: #{downsample_forward.1} parent=11 // pred_fallthru
        _
      // Predicated region
      $region17: #{downsample_forward.1} parent=11 // pred_check
        %p137 = pneg %p91
      $region18: #{downsample_forward.1} parent=11 // pred_check_branch
        %139 = sbr.rel (%p137) target = $region20
      $region19: #{downsample_forward.1} parent=11 // pred_region
        _
      $region20: #{downsample_forward.1} parent=11 // pred_fallthru
        _
    $region12: #{downsample_forward.1} parent=5 // pred_fallthru
      _
    %p140 = scmp.lt.s32.totalorder %s9, 2
    // Predicated region
    $region21: #{downsample_forward.1} parent=5 // pred_check
      %p141 = pneg %p140
    $region22: #{downsample_forward.1} parent=5 // pred_check_branch
      %143 = sbr.rel (%p141) target = $region24
    $region23: #{downsample_forward.1} parent=5 // pred_region
      // Predicated region
      $region25: #{downsample_forward.1} parent=23 // pred_check
        %p144 = pneg %p43
      $region26: #{downsample_forward.1} parent=23 // pred_check_branch
        %146 = sbr.rel (%p144) target = $region28
      $region27: #{downsample_forward.1} parent=23 // pred_region
        %s147 = smul.u32 8, %s17
        %p148 = scmp.lt.s32.totalorder %s16, 1
        %s149 = scalar_select %p148, %s16, 1
        %p150 = scmp.lt.s32.totalorder %s147, 7
        %s151 = scalar_select %p150, %s147, 7
        %s152 = smul.addr %s149, 8
        %s153 = sadd.s32 %s151, %s152
        %s154 = smul.addr %s153, 4
        %s155 = scalar_lea.vmem %s0, %s154
        %s156 = smul.u32 8, %s17
      $region28: #{downsample_forward.1} parent=23 // pred_fallthru
        _
    $region24: #{downsample_forward.1} parent=5 // pred_fallthru
      _
    %p157 = scmp.le.s32.totalorder 1, %s9
    %p158 = scmp.lt.s32.totalorder %s9, 3
    %p159 = pnand %p157, %p158
    %p160 = pneg %p159
    // Predicated region
    $region29: #{downsample_forward.1} parent=5 // pred_check
      _
    $region30: #{downsample_forward.1} parent=5 // pred_check_branch
      %162 = sbr.rel (%p159) target = $region32
    $region31: #{downsample_forward.1} parent=5 // pred_region
      %s163 = ssub.s32 %s9, 1
      %s164 = smul.u32 8, %s19
      %p165 = scmp.lt.s32.totalorder %s18, 1
      %s166 = scalar_select %p165, %s18, 1
      %p167 = scmp.lt.s32.totalorder %s164, 7
      %s168 = scalar_select %p167, %s164, 7
      %s169 = smul.addr %s166, 8
      %s170 = sadd.s32 %s168, %s169
      %s171 = smul.addr %s170, 4
      %s172 = scalar_lea.vmem %s0, %s171
      %p173 = pneg %p49
      %p174 = pneg %p46
      %p175 = pneg %p70
      %p176 = pneg %p67
      %p177 = pneg %p91
      %p178 = pneg %p88
      %p179 = pneg %p119
      %p180 = pneg %p116
      %s181 = smul.u32 8, %s19
      %p182 = scmp.lt.s32.totalorder %s18, 1
      %s183 = scalar_select %p182, %s18, 1
      %p184 = scmp.lt.s32.totalorder %s181, 7
      %s185 = scalar_select %p184, %s181, 7
      %s186 = smul.addr %s183, 8
      %s187 = sadd.s32 %s185, %s186
      %s188 = smul.addr %s187, 8
      %s189 = scalar_lea.vmem %s3, %s188
      %s190 = smul.u32 8, %s19
      %p191 = scmp.lt.s32.totalorder %s18, 1
      %s192 = scalar_select %p191, %s18, 1
      %p193 = scmp.lt.s32.totalorder %s190, 7
      %s194 = scalar_select %p193, %s190, 7
      %s195 = smul.addr %s192, 8
      %s196 = sadd.s32 %s194, %s195
      %s197 = smul.addr %s196, 4
      %s198 = scalar_lea.vmem %s0, %s197
      %s199 = smul.u32 8, %s19
      %s200 = smul.u32 8, %s19
      %p201 = scmp.lt.s32.totalorder %s18, 1
      %s202 = scalar_select %p201, %s18, 1
      %p203 = scmp.lt.s32.totalorder %s200, 7
      %s204 = scalar_select %p203, %s200, 7
      %s205 = smul.addr %s202, 8
      %s206 = sadd.s32 %s204, %s205
      %s207 = smul.addr %s206, 8
      %s208 = scalar_lea.vmem %s3, %s207
      %s209 = smul.u32 8, %s19
      %v211 = vld [vmem:[%s198] sm:$0xf]
      %v212 = vld [vmem:[%s198 + $0x4] sm:$0xf]
      %v213 = vld [vmem:[%s198 + $0x8] sm:$0xf]
      %v214 = vld [vmem:[%s198 + $0xc] sm:$0xf]
      %v215 = vld [vmem:[%s198 + $0x10] sm:$0xf]
      %v216 = vld [vmem:[%s198 + $0x14] sm:$0xf]
      %v217 = vld [vmem:[%s198 + $0x18] sm:$0xf]
      %v218 = vld [vmem:[%s198 + $0x1c] sm:$0xf]
      %v219 = vld [vmem:[%s1] sm:$0xf]
      %v220 = vld [vmem:[%s1 + $0x4] sm:$0xf]
      %v221 = vld [vmem:[%s1 + $0x8] sm:$0xf]
      %v222 = vld [vmem:[%s1 + $0xc] sm:$0xf]
      %v223 = vld [vmem:[%s1 + $0x10] sm:$0xf]
      %v224 = vld [vmem:[%s1 + $0x14] sm:$0xf]
      %v225 = vld [vmem:[%s1 + $0x18] sm:$0xf]
      %v226 = vld [vmem:[%s1 + $0x1c] sm:$0xf]
      %v227 = vld [vmem:[%s1 + $0x20] sm:$0xf]
      %v228 = vld [vmem:[%s1 + $0x24] sm:$0xf]
      %v229 = vld [vmem:[%s1 + $0x28] sm:$0xf]
      %v230 = vld [vmem:[%s1 + $0x2c] sm:$0xf]
      %v231 = vld [vmem:[%s1 + $0x30] sm:$0xf]
      %v232 = vld [vmem:[%s1 + $0x34] sm:$0xf]
      %v233 = vld [vmem:[%s1 + $0x38] sm:$0xf]
      %v234 = vld [vmem:[%s1 + $0x3c] sm:$0xf]
      %v235 = vld [vmem:[%s2] sm:$0x1]
      %v237 = vlaneseq
      %v238 = vshrl.u32 %v237, 7
      %v239 = vsub.s32 0, %v238
      %v240 = vrot.slane %v235, %v239
      %v250 = vunpack.c.l.b16 %v211
      %v251 = vunpack.c.l.b16 %v212
      %v252 = vunpack.c.l.b16 %v213
      %v253 = vunpack.c.l.b16 %v214
      %v254 = vunpack.c.l.b16 %v215
      %v255 = vunpack.c.l.b16 %v216
      %v256 = vunpack.c.l.b16 %v217
      %v257 = vunpack.c.l.b16 %v218
      %v258 = vpack.c.b16 %v251, %v250
      %v259 = vpack.c.b16 %v253, %v252
      %v260 = vpack.c.b16 %v255, %v254
      %v261 = vpack.c.b16 %v257, %v256
      %v282 = vunpack.c.l.b16 %v219
      %v283 = vunpack.c.l.b16 %v220
      %v284 = vunpack.c.l.b16 %v221
      %v285 = vunpack.c.l.b16 %v222
      %v286 = vunpack.c.l.b16 %v223
      %v287 = vunpack.c.l.b16 %v224
      %v288 = vunpack.c.l.b16 %v225
      %v289 = vunpack.c.l.b16 %v226
      %v290 = vunpack.c.l.b16 %v227
      %v291 = vunpack.c.l.b16 %v228
      %v292 = vunpack.c.l.b16 %v229
      %v293 = vunpack.c.l.b16 %v230
      %v294 = vunpack.c.l.b16 %v231
      %v295 = vunpack.c.l.b16 %v232
      %v296 = vunpack.c.l.b16 %v233
      %v297 = vunpack.c.l.b16 %v234
      %v298 = vpack.c.b16 %v283, %v282
      %v299 = vpack.c.b16 %v285, %v284
      %v300 = vpack.c.b16 %v287, %v286
      %v301 = vpack.c.b16 %v289, %v288
      %v302 = vpack.c.b16 %v291, %v290
      %v303 = vpack.c.b16 %v293, %v292
      %v304 = vpack.c.b16 %v295, %v294
      %v305 = vpack.c.b16 %v297, %v296
      %314 = vmatprep.subr.bf16.mxu0 0
      %315 = vmatpush1.bf16.msra.mxu0 %v298
      %316 = vmatprep.subr.bf16.mxu0 0
      %317 = vmatpush1.bf16.msra.mxu0 %v299
      %318 = vmatprep.subr.bf16.mxu0 0
      %319 = vmatpush1.bf16.msra.mxu0 %v300
      %320 = vmatprep.subr.bf16.mxu0 0
      %321 = vmatpush1.bf16.msra.mxu0 %v301
      %322 = vmatprep.subr.bf16.mxu0 0
      %323 = vmatpush1.bf16.msra.mxu0 %v302
      %324 = vmatprep.subr.bf16.mxu0 0
      %325 = vmatpush1.bf16.msra.mxu0 %v303
      %326 = vmatprep.subr.bf16.mxu0 0
      %327 = vmatpush1.bf16.msra.mxu0 %v304
      %328 = vmatprep.subr.bf16.mxu0 0
      %329 = vmatpush1.bf16.msra.mxu0 %v305
      %330 = vmatprep.subr.bf16.mxu0 0
      %331 = vmatpush1.bf16.msra.mxu0 0
      %332 = vmatprep.subr.bf16.mxu0 0
      %333 = vmatpush1.bf16.msra.mxu0 0
      %334 = vmatprep.subr.bf16.mxu0 0
      %335 = vmatpush1.bf16.msra.mxu0 0
      %336 = vmatprep.subr.bf16.mxu0 0
      %337 = vmatpush1.bf16.msra.mxu0 0
      %338 = vmatprep.subr.bf16.mxu0 0
      %339 = vmatpush1.bf16.msra.mxu0 0
      %340 = vmatprep.subr.bf16.mxu0 0
      %341 = vmatpush1.bf16.msra.mxu0 0
      %342 = vmatprep.subr.bf16.mxu0 0
      %343 = vmatpush1.bf16.msra.mxu0 0
      %344 = vmatprep.subr.bf16.mxu0 0
      %345 = vmatpush1.bf16.msra.mxu0 0
      %346 = vmatprep.mubr.bf16.mxu0 0
      %347 = vmatmul.mubr.bf16.gmra.mrb[0].mxu0 %v258
      %v348 = vpop.f32.mrb[0].mxu0
      %v349 = vadd.f32 %v240, %v348
      %v350 = vpop.f32.mrb[0].mxu0
      %v351 = vpop.f32.mrb[0].mxu0
      %v352 = vadd.f32 %v240, %v351
      %v353 = vpop.f32.mrb[0].mxu0
      %354 = vmatprep.mubr.bf16.mxu0 0
      %355 = vmatmul.mubr.bf16.gmra.mrb[0].mxu0 %v259
      %v356 = vpop.f32.mrb[0].mxu0
      %v357 = vadd.f32 %v240, %v356
      %v358 = vpop.f32.mrb[0].mxu0
      %v359 = vpop.f32.mrb[0].mxu0
      %v360 = vadd.f32 %v240, %v359
      %v361 = vpop.f32.mrb[0].mxu0
      %362 = vmatprep.mubr.bf16.mxu0 0
      %363 = vmatmul.mubr.bf16.gmra.mrb[0].mxu0 %v260
      %v364 = vpop.f32.mrb[0].mxu0
      %v365 = vadd.f32 %v240, %v364
      %v366 = vpop.f32.mrb[0].mxu0
      %v367 = vpop.f32.mrb[0].mxu0
      %v368 = vadd.f32 %v240, %v367
      %v369 = vpop.f32.mrb[0].mxu0
      %370 = vmatprep.mubr.bf16.mxu0 0
      %371 = vmatmul.mubr.bf16.gmra.mrb[0].mxu0 %v261
      %v372 = vpop.f32.mrb[0].mxu0
      %v373 = vadd.f32 %v240, %v372
      %v374 = vpop.f32.mrb[0].mxu0
      %v375 = vpop.f32.mrb[0].mxu0
      %v376 = vadd.f32 %v240, %v375
      %v377 = vpop.f32.mrb[0].mxu0
      %378 = vdwg.mxu0
      %379 = vst [vmem:[%s208] sm:$0xff] %v349
      %380 = vst [vmem:[%s208 + $0x8] sm:$0xff] %v352
      %381 = vst [vmem:[%s208 + $0x10] sm:$0xff] %v357
      %382 = vst [vmem:[%s208 + $0x18] sm:$0xff] %v360
      %383 = vst [vmem:[%s208 + $0x20] sm:$0xff] %v365
      %384 = vst [vmem:[%s208 + $0x28] sm:$0xff] %v368
      %385 = vst [vmem:[%s208 + $0x30] sm:$0xff] %v373
      %386 = vst [vmem:[%s208 + $0x38] sm:$0xff] %v376
      %s387 = smul.u32 8, %s19
      %p388 = scmp.lt.s32.totalorder %s18, 1
      %s389 = scalar_select %p388, %s18, 1
      %p390 = scmp.lt.s32.totalorder %s387, 7
      %s391 = scalar_select %p390, %s387, 7
      %s392 = smul.addr %s389, 8
      %s393 = sadd.s32 %s391, %s392
      %s394 = smul.addr %s393, 8
      %s395 = scalar_lea.vmem %s3, %s394
      // Predicated region
      $region33: #{downsample_forward.1} parent=31 // pred_check
        %p396 = pneg %p116
      $region34: #{downsample_forward.1} parent=31 // pred_check_branch
        %398 = sbr.rel (%p396) target = $region36
      $region35: #{downsample_forward.1} parent=31 // pred_region
        %s399 = smul.u32 8, %s19
      $region36: #{downsample_forward.1} parent=31 // pred_fallthru
        _
    $region32: #{downsample_forward.1} parent=5 // pred_fallthru
      _
    %p400 = scmp.le.s32.totalorder 2, %s9
    // Predicated region
    $region37: #{downsample_forward.1} parent=5 // pred_check
      %p401 = pneg %p400
    $region38: #{downsample_forward.1} parent=5 // pred_check_branch
      %403 = sbr.rel (%p401) target = $region40
    $region39: #{downsample_forward.1} parent=5 // pred_region
      %s404 = ssub.s32 %s9, 2
      // Predicated region
      $region41: #{downsample_forward.1} parent=39 // pred_check
        %p405 = pneg %p122
      $region42: #{downsample_forward.1} parent=39 // pred_check_branch
        %407 = sbr.rel (%p405) target = $region44
      $region43: #{downsample_forward.1} parent=39 // pred_region
        %s408 = smul.u32 8, %s21
        %p409 = scmp.lt.s32.totalorder %s20, 1
        %s410 = scalar_select %p409, %s20, 1
        %p411 = scmp.lt.s32.totalorder %s408, 7
        %s412 = scalar_select %p411, %s408, 7
        %s413 = smul.addr %s410, 8
        %s414 = sadd.s32 %s412, %s413
        %s415 = smul.addr %s414, 8
        %s416 = scalar_lea.vmem %s3, %s415
      $region44: #{downsample_forward.1} parent=39 // pred_fallthru
        _
    $region40: #{downsample_forward.1} parent=5 // pred_fallthru
      _
  $region6: #{downsample_forward.1} parent=0 // loop_footer
    %s13 = sadd.s32 1, %s9
  $region7: #{downsample_forward.1} parent=0 // loop_footer_branch
    %8 = sbr.rel target = $region3
  $region8: #{downsample_forward.1} parent=0 // loop_exit
    _

</llo_original>
